<compile_context>
chip_gen: v7x
topology: tpu7x:2x2x1
jax: 0.10.0
libtpu: 0.0.40
codegen_flags: <defaults>
</compile_context>

<pallas_src>
import jax
import jax.numpy as jnp
from jax.experimental import pallas as pl
from jax.experimental.pallas import tpu as pltpu

INPUT_SIZE = 57
HIDDEN_SIZE = 50
OUTPUT_SIZE = 9

# Padded / packed kernel layout.
M_PAD = 8              # sublane tile (rows); row 0 is the real example
IN_PAD = 128           # 57  -> 128 (x half of the fused operand)
H_PAD = 128            # 50  -> 128 (h half of the fused operand)
K_FUSED = 2 * H_PAD    # fused [x | h] contraction dim = 256
G_FUSED = 4 * H_PAD    # fused gate columns [r | z | gi_n | gh_n] = 512
OUT_PAD = 128          # 9   -> 128
NEG_INF = -1.0e30      # masks padded logit lanes inside the linear bias (f32 only)


def char_rnn_classify_kernel(
    x_ref, h0_ref,
    w0_ref, b0_ref, w1_ref, b1_ref,
    wl_ref, bl_ref,
    logp_ref, h_ref,
):
    t = pl.program_id(0)

    # Initialize the resident hidden carry from h0 on the first step.
    @pl.when(t == 0)
    def _():
        h_ref[...] = h0_ref[...]

    x = x_ref[0]        # (8, 128) f32; rows >= B and cols >= 57 are zero
    h_l0 = h_ref[0]     # (8, 128) f32 carry, layer 0
    h_l1 = h_ref[1]     # (8, 128) f32 carry, layer 1

    def gru_cell(xin, h, w_ref_, b_ref_):
        # One MXU push per layer: [x | h] (8,256) @ (256,512), f32 accumulation.
        xh = jnp.concatenate([xin, h], axis=-1).astype(w_ref_.dtype)
        g = jnp.dot(xh, w_ref_[...], preferred_element_type=jnp.float32) + b_ref_[...]
        r = jax.nn.sigmoid(g[:, 0:H_PAD])                       # x@Wr + h@Ur + br
        z = jax.nn.sigmoid(g[:, H_PAD:2 * H_PAD])               # x@Wz + h@Uz + bz
        n = jnp.tanh(g[:, 2 * H_PAD:3 * H_PAD]                  # x@Wn + bin
                     + r * g[:, 3 * H_PAD:4 * H_PAD])           # + r*(h@Un + bhn)
        return (1.0 - z) * n + z * h

    h0_new = gru_cell(x, h_l0, w0_ref, b0_ref)
    # TODO(synk): inter-layer dropout(0.3) is training-only; inference forward omits it.
    h1_new = gru_cell(h0_new, h_l1, w1_ref, b1_ref)

    h_ref[0] = h0_new
    h_ref[1] = h1_new

    # gru_linear + LogSoftmax: padded bias lanes are -1e30 so the softmax over
    # the full 128-lane row only "sees" the 9 real classes.
    logits = (jnp.dot(h1_new.astype(wl_ref.dtype), wl_ref[...],
                      preferred_element_type=jnp.float32) + bl_ref[...])
    m = jnp.max(logits, axis=1, keepdims=True)
    shifted = logits - m
    lse = jnp.log(jnp.sum(jnp.exp(shifted), axis=1, keepdims=True))
    logp_ref[0] = shifted - lse


def pack_params(p, weight_dtype=jnp.bfloat16):
    """Fuse [x|h] per layer, gate-stack, pre-sum biases and pad to the
    lane-dense kernel layout.  Weights cast to `weight_dtype`, biases stay f32."""
    H = HIDDEN_SIZE

    def fused_layer(wih, whh, bih, bhh):
        # wih: (3, in, H), whh: (3, H, H); gate order [r, z, n].
        in_rows = wih.shape[1]
        w = jnp.zeros((K_FUSED, G_FUSED), jnp.float32)
        # r gate: cols 0:H   -> wih_r on x rows, whh_r on h rows
        w = w.at[:in_rows, 0:H].set(wih[0])
        w = w.at[H_PAD:H_PAD + H, 0:H].set(whh[0])
        # z gate: cols 128:128+H
        w = w.at[:in_rows, H_PAD:H_PAD + H].set(wih[1])
        w = w.at[H_PAD:H_PAD + H, H_PAD:H_PAD + H].set(whh[1])
        # gi_n: cols 256:256+H (x rows only), gh_n: cols 384:384+H (h rows only)
        w = w.at[:in_rows, 2 * H_PAD:2 * H_PAD + H].set(wih[2])
        w = w.at[H_PAD:H_PAD + H, 3 * H_PAD:3 * H_PAD + H].set(whh[2])

        b = jnp.zeros((1, G_FUSED), jnp.float32)
        b = b.at[:, 0:H].set(bih[0] + bhh[0])
        b = b.at[:, H_PAD:H_PAD + H].set(bih[1] + bhh[1])
        b = b.at[:, 2 * H_PAD:2 * H_PAD + H].set(bih[2])
        b = b.at[:, 3 * H_PAD:3 * H_PAD + H].set(bhh[2])
        return w.astype(weight_dtype), b

    w0, b0 = fused_layer(p["wih0"], p["whh0"], p["bih0"], p["bhh0"])
    w1, b1 = fused_layer(p["wih1"], p["whh1"], p["bih1"], p["bhh1"])
    wl = (jnp.zeros((H_PAD, OUT_PAD), jnp.float32)
          .at[:H, :OUTPUT_SIZE].set(p["wl"]).astype(weight_dtype))
    bl = jnp.full((1, OUT_PAD), NEG_INF, jnp.float32).at[:, :OUTPUT_SIZE].set(p["bl"])
    return {"w0": w0, "b0": b0, "w1": w1, "b1": b1, "wl": wl, "bl": bl}


def char_rnn_classify_seq(x_seq, h0, packed):
    """Run the full per-character recurrence in ONE pallas_call.

    x_seq (T, B, 57) with B<=8, h0 (2, B, 50) or None
    -> (logprobs (T, B, 9), hidden (2, B, 50))."""
    T, B, _ = x_seq.shape
    assert B <= M_PAD
    if h0 is None:
        h0 = jnp.zeros((2, B, HIDDEN_SIZE), jnp.float32)

    x_p = jnp.zeros((T, M_PAD, IN_PAD), jnp.float32).at[:, :B, :INPUT_SIZE].set(x_seq)
    h_p = jnp.zeros((2, M_PAD, H_PAD), jnp.float32).at[:, :B, :HIDDEN_SIZE].set(h0)

    const2 = lambda t: (0, 0)
    const3 = lambda t: (0, 0, 0)

    logp, hout = pl.pallas_call(
        char_rnn_classify_kernel,
        out_shape=(
            jax.ShapeDtypeStruct((T, M_PAD, OUT_PAD), jnp.float32),
            jax.ShapeDtypeStruct((2, M_PAD, H_PAD), jnp.float32),
        ),
        grid_spec=pltpu.PrefetchScalarGridSpec(
            num_scalar_prefetch=0,
            grid=(T,),
            in_specs=[
                pl.BlockSpec((1, M_PAD, IN_PAD), lambda t: (t, 0, 0)),   # x[t]
                pl.BlockSpec((2, M_PAD, H_PAD), const3),                 # h0 (read at t==0)
                pl.BlockSpec((K_FUSED, G_FUSED), const2),                # w0 (resident)
                pl.BlockSpec((1, G_FUSED), const2),                      # b0
                pl.BlockSpec((K_FUSED, G_FUSED), const2),                # w1 (resident)
                pl.BlockSpec((1, G_FUSED), const2),                      # b1
                pl.BlockSpec((H_PAD, OUT_PAD), const2),                  # wl (resident)
                pl.BlockSpec((1, OUT_PAD), const2),                      # bl
            ],
            out_specs=[
                pl.BlockSpec((1, M_PAD, OUT_PAD), lambda t: (t, 0, 0)),  # per-step logprobs
                pl.BlockSpec((2, M_PAD, H_PAD), const3),                 # resident hidden carry
            ],
        ),
        compiler_params=pltpu.CompilerParams(dimension_semantics=("arbitrary",)),
    )(x_p, h_p,
      packed["w0"], packed["b0"], packed["w1"], packed["b1"],
      packed["wl"], packed["bl"])
    return logp[:, :B, :OUTPUT_SIZE], hout[:, :B, :HIDDEN_SIZE]


def char_rnn_classify(x, h0, packed):
    """The module's forward(): one time step.  x (B, 57), h0 (2, B, 50) or None
    -> (logprobs (B, 9), hidden (2, B, 50))."""
    logp_seq, hout = char_rnn_classify_seq(x[None], h0, packed)
    return logp_seq[0], hout


def init_params(key):
    """Deterministic logical parameters matching CharRNNClassify.__init__ shapes.

    GRU / Linear weights U(-1/sqrt(H), 1/sqrt(H)), stored gate-stacked and
    pre-transposed: wih (3, in, H), whh (3, H, H), biases (3, 1, H); Linear
    wl (H, out), bl (1, out)."""
    ks = jax.random.split(key, 12)
    bound = 1.0 / jnp.sqrt(HIDDEN_SIZE)

    def u(k, shape):
        return jax.random.uniform(k, shape, jnp.float32, minval=-bound, maxval=bound)

    return {
        "wih0": u(ks[0], (3, INPUT_SIZE, HIDDEN_SIZE)),
        "whh0": u(ks[1], (3, HIDDEN_SIZE, HIDDEN_SIZE)),
        "bih0": u(ks[2], (3, 1, HIDDEN_SIZE)),
        "bhh0": u(ks[3], (3, 1, HIDDEN_SIZE)),
        "wih1": u(ks[4], (3, HIDDEN_SIZE, HIDDEN_SIZE)),
        "whh1": u(ks[5], (3, HIDDEN_SIZE, HIDDEN_SIZE)),
        "bih1": u(ks[6], (3, 1, HIDDEN_SIZE)),
        "bhh1": u(ks[7], (3, 1, HIDDEN_SIZE)),
        "wl": u(ks[8], (HIDDEN_SIZE, OUTPUT_SIZE)),
        "bl": u(ks[9], (1, OUTPUT_SIZE)),
    }


def reference_step(x, h, p):
    """Pure-JAX reference of one forward() call (PyTorch GRU semantics)."""
    def cell(xin, hh, wih, whh, bih, bhh):
        r = jax.nn.sigmoid(xin @ wih[0] + bih[0] + hh @ whh[0] + bhh[0])
        z = jax.nn.sigmoid(xin @ wih[1] + bih[1] + hh @ whh[1] + bhh[1])
        n = jnp.tanh(xin @ wih[2] + bih[2] + r * (hh @ whh[2] + bhh[2]))
        return (1.0 - z) * n + z * hh

    h0n = cell(x, h[0], p["wih0"], p["whh0"], p["bih0"], p["bhh0"])
    h1n = cell(h0n, h[1], p["wih1"], p["whh1"], p["bih1"], p["bhh1"])
    logits = h1n @ p["wl"] + p["bl"]
    return jax.nn.log_softmax(logits, axis=1), jnp.stack([h0n, h1n], axis=0)


def reference_seq(x_seq, h0, p):
    h = h0
    logps = []
    for t in range(x_seq.shape[0]):
        logp, h = reference_step(x_seq[t], h, p)
        logps.append(logp)
    return jnp.stack(logps, axis=0), h


if __name__ == "__main__":
    key = jax.random.PRNGKey(0)
    k_param, k_x, k_seq = jax.random.split(key, 3)
    params = init_params(k_param)

    x = jax.random.normal(k_x, (1, INPUT_SIZE), jnp.float32)
    h0 = jnp.zeros((2, 1, HIDDEN_SIZE), jnp.float32)

    # 1) Exact-math check (f32 weights) of the module's forward(): T=1, B=1.
    packed_f32 = pack_params(params, weight_dtype=jnp.float32)
    logp, hidden = char_rnn_classify(x, h0, packed_f32)
    jax.block_until_ready((logp, hidden))
    ref_logp, ref_hidden = reference_step(x, h0, params)
    assert logp.shape == (1, OUTPUT_SIZE)
    assert hidden.shape == (2, 1, HIDDEN_SIZE)
    assert jnp.allclose(logp, ref_logp, atol=1e-4, rtol=1e-4)
    assert jnp.allclose(hidden, ref_hidden, atol=1e-4, rtol=1e-4)

    # 2) Production path: bf16 weights + in-kernel multi-step recurrence (T=8),
    #    weights stay VMEM-resident across the whole sequence (one launch).
    #    Tolerance deliberately relaxed for bf16 weights (activations stay f32).
    packed_bf16 = pack_params(params)  # bf16 weights, f32 biases
    T = 8
    x_seq = jax.random.normal(k_seq, (T, 1, INPUT_SIZE), jnp.float32)
    logp_seq, hidden_seq = char_rnn_classify_seq(x_seq, None, packed_bf16)
    jax.block_until_ready((logp_seq, hidden_seq))
    ref_logp_seq, ref_hidden_seq = reference_seq(
        x_seq, jnp.zeros((2, 1, HIDDEN_SIZE), jnp.float32), params)
    assert logp_seq.shape == (T, 1, OUTPUT_SIZE)
    assert hidden_seq.shape == (2, 1, HIDDEN_SIZE)
    assert jnp.allclose(logp_seq, ref_logp_seq, atol=2e-2, rtol=2e-2)
    assert jnp.allclose(hidden_seq, ref_hidden_seq, atol=2e-2, rtol=2e-2)

    print("KERNEL_OK")
</pallas_src>

<mosaic_0001>
module attributes {stable_mosaic.version = 11 : i64} {
  func.func @char_rnn_classify_kernel(%arg0: i32, %arg1: memref<1x8x128xf32, #tpu.memory_space<vmem>>, %arg2: memref<2x8x128xf32, #tpu.memory_space<vmem>>, %arg3: memref<256x512xf32, #tpu.memory_space<vmem>>, %arg4: memref<1x512xf32, #tpu.memory_space<vmem>>, %arg5: memref<256x512xf32, #tpu.memory_space<vmem>>, %arg6: memref<1x512xf32, #tpu.memory_space<vmem>>, %arg7: memref<128x128xf32, #tpu.memory_space<vmem>>, %arg8: memref<1x128xf32, #tpu.memory_space<vmem>>, %arg9: memref<1x8x128xf32, #tpu.memory_space<vmem>>, %arg10: memref<2x8x128xf32, #tpu.memory_space<vmem>>) attributes {dimension_semantics = [#tpu.dimension_semantics<arbitrary>], iteration_bounds = array<i64: 1>, scalar_prefetch = 0 : i64, scratch_operands = 0 : i64, tpu.core_type = #tpu.core_type<tc>, window_params = [{transform_indices = @transform_0, window_bounds = array<i64: 1, 8, 128>}, {pipeline_mode = #tpu.pipeline_mode<synchronous>, transform_indices = @transform_1, window_bounds = array<i64: 2, 8, 128>}, {pipeline_mode = #tpu.pipeline_mode<synchronous>, transform_indices = @transform_2, window_bounds = array<i64: 256, 512>}, {pipeline_mode = #tpu.pipeline_mode<synchronous>, transform_indices = @transform_3, window_bounds = array<i64: 1, 512>}, {pipeline_mode = #tpu.pipeline_mode<synchronous>, transform_indices = @transform_4, window_bounds = array<i64: 256, 512>}, {pipeline_mode = #tpu.pipeline_mode<synchronous>, transform_indices = @transform_5, window_bounds = array<i64: 1, 512>}, {pipeline_mode = #tpu.pipeline_mode<synchronous>, transform_indices = @transform_6, window_bounds = array<i64: 128, 128>}, {pipeline_mode = #tpu.pipeline_mode<synchronous>, transform_indices = @transform_7, window_bounds = array<i64: 1, 128>}, {transform_indices = @transform_8, window_bounds = array<i64: 1, 8, 128>}, {pipeline_mode = #tpu.pipeline_mode<synchronous>, transform_indices = @transform_9, window_bounds = array<i64: 2, 8, 128>}]} {
    %c0_i32 = arith.constant 0 : i32
    %0 = arith.cmpi eq, %arg0, %c0_i32 : i32
    %1 = arith.extui %0 : i1 to i32
    %c0_i32_0 = arith.constant 0 : i32
    %2 = arith.cmpi ne, %1, %c0_i32_0 : i32
    scf.if %2 {
      %c0_39 = arith.constant 0 : index
      %c0_40 = arith.constant 0 : index
      %c0_41 = arith.constant 0 : index
      %89 = vector.load %arg2[%c0_39, %c0_40, %c0_41] : memref<2x8x128xf32, #tpu.memory_space<vmem>>, vector<2x8x128xf32>
      %c0_42 = arith.constant 0 : index
      %c0_43 = arith.constant 0 : index
      %c0_44 = arith.constant 0 : index
      %90 = vector.load %arg10[%c0_42, %c0_43, %c0_44] : memref<2x8x128xf32, #tpu.memory_space<vmem>>, vector<2x8x128xf32>
      tpu.vector_store %arg10[%c0_42, %c0_43, %c0_44], %89 {strides = array<i32>} : memref<2x8x128xf32, #tpu.memory_space<vmem>>, vector<2x8x128xf32>,
    } else {
    }
    %c0 = arith.constant 0 : index
    %c0_1 = arith.constant 0 : index
    %c0_2 = arith.constant 0 : index
    %3 = vector.load %arg1[%c0, %c0_1, %c0_2] : memref<1x8x128xf32, #tpu.memory_space<vmem>>, vector<1x8x128xf32>
    %4 = vector.shape_cast %3 : vector<1x8x128xf32> to vector<8x128xf32>
    %c0_3 = arith.constant 0 : index
    %c0_4 = arith.constant 0 : index
    %c0_5 = arith.constant 0 : index
    %5 = vector.load %arg10[%c0_3, %c0_4, %c0_5] : memref<2x8x128xf32, #tpu.memory_space<vmem>>, vector<1x8x128xf32>
    %6 = vector.shape_cast %5 : vector<1x8x128xf32> to vector<8x128xf32>
    %c1 = arith.constant 1 : index
    %c0_6 = arith.constant 0 : index
    %c0_7 = arith.constant 0 : index
    %7 = vector.load %arg10[%c1, %c0_6, %c0_7] : memref<2x8x128xf32, #tpu.memory_space<vmem>>, vector<1x8x128xf32>
    %8 = vector.shape_cast %7 : vector<1x8x128xf32> to vector<8x128xf32>
    %9 = tpu.concatenate %4, %6 in 1 : vector<8x128xf32>, vector<8x128xf32> -> vector<8x256xf32>
    %c0_8 = arith.constant 0 : index
    %c0_9 = arith.constant 0 : index
    %10 = vector.load %arg3[%c0_8, %c0_9] : memref<256x512xf32, #tpu.memory_space<vmem>>, vector<256x512xf32>
    %cst = arith.constant dense<0.000000e+00> : vector<8x512xf32>
    %11 = tpu.matmul %9, %10, %cst {dimension_numbers = #tpu.dot_dimension_numbers<[1], [0], [0], [1], [0, 0, 1, 1], [], []>} : vector<8x256xf32>, vector<256x512xf32>, vector<8x512xf32> -> vector<8x512xf32>
    %c0_10 = arith.constant 0 : index
    %c0_11 = arith.constant 0 : index
    %12 = vector.load %arg4[%c0_10, %c0_11] : memref<1x512xf32, #tpu.memory_space<vmem>>, vector<1x512xf32>
    %13 = vector.broadcast %12 : vector<1x512xf32> to vector<8x512xf32>
    %14 = arith.addf %11, %13 : vector<8x512xf32>
    %15 = vector.extract_strided_slice %14 {offsets = [0, 0], sizes = [8, 128], strides = [1, 1]} : vector<8x512xf32> to vector<8x128xf32>
    %16 = arith.negf %15 : vector<8x128xf32>
    %17 = math.exp %16 : vector<8x128xf32>
    %cst_12 = arith.constant 1.000000e+00 : f32
    %18 = vector.broadcast %cst_12 : f32 to vector<8x128xf32>
    %19 = arith.addf %18, %17 : vector<8x128xf32>
    %20 = arith.divf %18, %19 : vector<8x128xf32>
    %21 = vector.extract_strided_slice %14 {offsets = [0, 128], sizes = [8, 128], strides = [1, 1]} : vector<8x512xf32> to vector<8x128xf32>
    %22 = arith.negf %21 : vector<8x128xf32>
    %23 = math.exp %22 : vector<8x128xf32>
    %cst_13 = arith.constant 1.000000e+00 : f32
    %24 = vector.broadcast %cst_13 : f32 to vector<8x128xf32>
    %25 = arith.addf %24, %23 : vector<8x128xf32>
    %26 = arith.divf %24, %25 : vector<8x128xf32>
    %27 = vector.extract_strided_slice %14 {offsets = [0, 256], sizes = [8, 128], strides = [1, 1]} : vector<8x512xf32> to vector<8x128xf32>
    %28 = vector.extract_strided_slice %14 {offsets = [0, 384], sizes = [8, 128], strides = [1, 1]} : vector<8x512xf32> to vector<8x128xf32>
    %29 = arith.mulf %20, %28 : vector<8x128xf32>
    %30 = arith.addf %27, %29 : vector<8x128xf32>
    %31 = math.tanh %30 : vector<8x128xf32>
    %cst_14 = arith.constant 1.000000e+00 : f32
    %32 = vector.broadcast %cst_14 : f32 to vector<8x128xf32>
    %33 = arith.subf %32, %26 : vector<8x128xf32>
    %34 = arith.mulf %33, %31 : vector<8x128xf32>
    %35 = arith.mulf %26, %6 : vector<8x128xf32>
    %36 = arith.addf %34, %35 : vector<8x128xf32>
    %37 = tpu.concatenate %36, %8 in 1 : vector<8x128xf32>, vector<8x128xf32> -> vector<8x256xf32>
    %c0_15 = arith.constant 0 : index
    %c0_16 = arith.constant 0 : index
    %38 = vector.load %arg5[%c0_15, %c0_16] : memref<256x512xf32, #tpu.memory_space<vmem>>, vector<256x512xf32>
    %cst_17 = arith.constant dense<0.000000e+00> : vector<8x512xf32>
    %39 = tpu.matmul %37, %38, %cst_17 {dimension_numbers = #tpu.dot_dimension_numbers<[1], [0], [0], [1], [0, 0, 1, 1], [], []>} : vector<8x256xf32>, vector<256x512xf32>, vector<8x512xf32> -> vector<8x512xf32>
    %c0_18 = arith.constant 0 : index
    %c0_19 = arith.constant 0 : index
    %40 = vector.load %arg6[%c0_18, %c0_19] : memref<1x512xf32, #tpu.memory_space<vmem>>, vector<1x512xf32>
    %41 = vector.broadcast %40 : vector<1x512xf32> to vector<8x512xf32>
    %42 = arith.addf %39, %41 : vector<8x512xf32>
    %43 = vector.extract_strided_slice %42 {offsets = [0, 0], sizes = [8, 128], strides = [1, 1]} : vector<8x512xf32> to vector<8x128xf32>
    %44 = arith.negf %43 : vector<8x128xf32>
    %45 = math.exp %44 : vector<8x128xf32>
    %cst_20 = arith.constant 1.000000e+00 : f32
    %46 = vector.broadcast %cst_20 : f32 to vector<8x128xf32>
    %47 = arith.addf %46, %45 : vector<8x128xf32>
    %48 = arith.divf %46, %47 : vector<8x128xf32>
    %49 = vector.extract_strided_slice %42 {offsets = [0, 128], sizes = [8, 128], strides = [1, 1]} : vector<8x512xf32> to vector<8x128xf32>
    %50 = arith.negf %49 : vector<8x128xf32>
    %51 = math.exp %50 : vector<8x128xf32>
    %cst_21 = arith.constant 1.000000e+00 : f32
    %52 = vector.broadcast %cst_21 : f32 to vector<8x128xf32>
    %53 = arith.addf %52, %51 : vector<8x128xf32>
    %54 = arith.divf %52, %53 : vector<8x128xf32>
    %55 = vector.extract_strided_slice %42 {offsets = [0, 256], sizes = [8, 128], strides = [1, 1]} : vector<8x512xf32> to vector<8x128xf32>
    %56 = vector.extract_strided_slice %42 {offsets = [0, 384], sizes = [8, 128], strides = [1, 1]} : vector<8x512xf32> to vector<8x128xf32>
    %57 = arith.mulf %48, %56 : vector<8x128xf32>
    %58 = arith.addf %55, %57 : vector<8x128xf32>
    %59 = math.tanh %58 : vector<8x128xf32>
    %cst_22 = arith.constant 1.000000e+00 : f32
    %60 = vector.broadcast %cst_22 : f32 to vector<8x128xf32>
    %61 = arith.subf %60, %54 : vector<8x128xf32>
    %62 = arith.mulf %61, %59 : vector<8x128xf32>
    %63 = arith.mulf %54, %8 : vector<8x128xf32>
    %64 = arith.addf %62, %63 : vector<8x128xf32>
    %c0_23 = arith.constant 0 : index
    %c0_24 = arith.constant 0 : index
    %c0_25 = arith.constant 0 : index
    %65 = vector.load %arg10[%c0_23, %c0_24, %c0_25] : memref<2x8x128xf32, #tpu.memory_space<vmem>>, vector<1x8x128xf32>
    %66 = vector.shape_cast %65 : vector<1x8x128xf32> to vector<8x128xf32>
    %67 = vector.shape_cast %36 : vector<8x128xf32> to vector<1x8x128xf32>
    tpu.vector_store %arg10[%c0_23, %c0_24, %c0_25], %67 {strides = array<i32>} : memref<2x8x128xf32, #tpu.memory_space<vmem>>, vector<1x8x128xf32>,
    %c1_26 = arith.constant 1 : index
    %c0_27 = arith.constant 0 : index
    %c0_28 = arith.constant 0 : index
    %68 = vector.load %arg10[%c1_26, %c0_27, %c0_28] : memref<2x8x128xf32, #tpu.memory_space<vmem>>, vector<1x8x128xf32>
    %69 = vector.shape_cast %68 : vector<1x8x128xf32> to vector<8x128xf32>
    %70 = vector.shape_cast %64 : vector<8x128xf32> to vector<1x8x128xf32>
    tpu.vector_store %arg10[%c1_26, %c0_27, %c0_28], %70 {strides = array<i32>} : memref<2x8x128xf32, #tpu.memory_space<vmem>>, vector<1x8x128xf32>,
    %c0_29 = arith.constant 0 : index
    %c0_30 = arith.constant 0 : index
    %71 = vector.load %arg7[%c0_29, %c0_30] : memref<128x128xf32, #tpu.memory_space<vmem>>, vector<128x128xf32>
    %cst_31 = arith.constant dense<0.000000e+00> : vector<8x128xf32>
    %72 = tpu.matmul %64, %71, %cst_31 {dimension_numbers = #tpu.dot_dimension_numbers<[1], [0], [0], [1], [0, 0, 1, 1], [], []>} : vector<8x128xf32>, vector<128x128xf32>, vector<8x128xf32> -> vector<8x128xf32>
    %c0_32 = arith.constant 0 : index
    %c0_33 = arith.constant 0 : index
    %73 = vector.load %arg8[%c0_32, %c0_33] : memref<1x128xf32, #tpu.memory_space<vmem>>, vector<1x128xf32>
    %74 = vector.broadcast %73 : vector<1x128xf32> to vector<8x128xf32>
    %75 = arith.addf %72, %74 : vector<8x128xf32>
    %cst_34 = arith.constant dense<0xFF800000> : vector<8xf32>
    %76 = vector.multi_reduction <maximumf>, %75, %cst_34 [1] : vector<8x128xf32> to vector<8xf32>
    %77 = vector.shape_cast %76 : vector<8xf32> to vector<8x1xf32>
    %78 = vector.broadcast %77 : vector<8x1xf32> to vector<8x128xf32>
    %79 = arith.subf %75, %78 : vector<8x128xf32>
    %80 = math.exp %79 : vector<8x128xf32>
    %cst_35 = arith.constant dense<0.000000e+00> : vector<8xf32>
    %81 = vector.multi_reduction <add>, %80, %cst_35 [1] : vector<8x128xf32> to vector<8xf32>
    %82 = vector.shape_cast %81 : vector<8xf32> to vector<8x1xf32>
    %83 = math.log %82 : vector<8x1xf32>
    %84 = vector.broadcast %83 : vector<8x1xf32> to vector<8x128xf32>
    %85 = arith.subf %79, %84 : vector<8x128xf32>
    %c0_36 = arith.constant 0 : index
    %c0_37 = arith.constant 0 : index
    %c0_38 = arith.constant 0 : index
    %86 = vector.load %arg9[%c0_36, %c0_37, %c0_38] : memref<1x8x128xf32, #tpu.memory_space<vmem>>, vector<1x8x128xf32>
    %87 = vector.shape_cast %86 : vector<1x8x128xf32> to vector<8x128xf32>
    %88 = vector.shape_cast %85 : vector<8x128xf32> to vector<1x8x128xf32>
    tpu.vector_store %arg9[%c0_36, %c0_37, %c0_38], %88 {strides = array<i32>} : memref<1x8x128xf32, #tpu.memory_space<vmem>>, vector<1x8x128xf32>,
    return
  }
  func.func @transform_0(%arg0: i32) -> (i32, i32, i32) {
    %c0_i32 = arith.constant 0 : i32
    %c0_i32_0 = arith.constant 0 : i32
    %c0_i32_1 = arith.constant 0 : i32
    return %arg0, %c0_i32, %c0_i32_0 : i32, i32, i32
  }
  func.func @transform_1(%arg0: i32) -> (i32, i32, i32) {
    %c0_i32 = arith.constant 0 : i32
    %c0_i32_0 = arith.constant 0 : i32
    %c0_i32_1 = arith.constant 0 : i32
    %c0_i32_2 = arith.constant 0 : i32
    return %c0_i32, %c0_i32_0, %c0_i32_1 : i32, i32, i32
  }
  func.func @transform_2(%arg0: i32) -> (i32, i32) {
    %c0_i32 = arith.constant 0 : i32
    %c0_i32_0 = arith.constant 0 : i32
    %c0_i32_1 = arith.constant 0 : i32
    return %c0_i32, %c0_i32_0 : i32, i32
  }
  func.func @transform_3(%arg0: i32) -> (i32, i32) {
    %c0_i32 = arith.constant 0 : i32
    %c0_i32_0 = arith.constant 0 : i32
    %c0_i32_1 = arith.constant 0 : i32
    return %c0_i32, %c0_i32_0 : i32, i32
  }
  func.func @transform_4(%arg0: i32) -> (i32, i32) {
    %c0_i32 = arith.constant 0 : i32
    %c0_i32_0 = arith.constant 0 : i32
    %c0_i32_1 = arith.constant 0 : i32
    return %c0_i32, %c0_i32_0 : i32, i32
  }
  func.func @transform_5(%arg0: i32) -> (i32, i32) {
    %c0_i32 = arith.constant 0 : i32
    %c0_i32_0 = arith.constant 0 : i32
    %c0_i32_1 = arith.constant 0 : i32
    return %c0_i32, %c0_i32_0 : i32, i32
  }
  func.func @transform_6(%arg0: i32) -> (i32, i32) {
    %c0_i32 = arith.constant 0 : i32
    %c0_i32_0 = arith.constant 0 : i32
    %c0_i32_1 = arith.constant 0 : i32
    return %c0_i32, %c0_i32_0 : i32, i32
  }
  func.func @transform_7(%arg0: i32) -> (i32, i32) {
    %c0_i32 = arith.constant 0 : i32
    %c0_i32_0 = arith.constant 0 : i32
    %c0_i32_1 = arith.constant 0 : i32
    return %c0_i32, %c0_i32_0 : i32, i32
  }
  func.func @transform_8(%arg0: i32) -> (i32, i32, i32) {
    %c0_i32 = arith.constant 0 : i32
    %c0_i32_0 = arith.constant 0 : i32
    %c0_i32_1 = arith.constant 0 : i32
    return %arg0, %c0_i32, %c0_i32_0 : i32, i32, i32
  }
  func.func @transform_9(%arg0: i32) -> (i32, i32, i32) {
    %c0_i32 = arith.constant 0 : i32
    %c0_i32_0 = arith.constant 0 : i32
    %c0_i32_1 = arith.constant 0 : i32
    %c0_i32_2 = arith.constant 0 : i32
    return %c0_i32, %c0_i32_0, %c0_i32_1 : i32, i32, i32
  }
}

</mosaic_0001>

<llo_original>
// kernel: tpu_custom_call.1
$region0: #{tpu_custom_call.1}
  #allocation0 [shape = 'u32[]', space=smem, size = 0x4, offset = 0x4, fixed_abs, tag = 'smem constant byte address 0x4 - core index']
  #allocation1 [shape = 'u32[144,128]{1,0:T(1,128)}', space=vmem, size = 0x12000, scoped, tag = 'internal scratch']
  %s0 = inlined_call_operand.hbm [shape: f32[1,8,128], index: 0, kind: input, shape index: {}]
  %s1 = inlined_call_operand.hbm [shape: f32[2,8,128], index: 1, kind: input, shape index: {}]
  %s2 = inlined_call_operand.hbm [shape: f32[256,512], index: 2, kind: input, shape index: {}]
  %s3 = inlined_call_operand.vmem [shape: f32[1,512], index: 3, kind: input, shape index: {}]
  %s4 = inlined_call_operand.hbm [shape: f32[256,512], index: 4, kind: input, shape index: {}]
  %s5 = inlined_call_operand.vmem [shape: f32[1,512], index: 5, kind: input, shape index: {}]
  %s6 = inlined_call_operand.hbm [shape: f32[128,128], index: 6, kind: input, shape index: {}]
  %s7 = inlined_call_operand.vmem [shape: f32[1,128], index: 7, kind: input, shape index: {}]
  %s8 = inlined_call_operand.hbm [shape: f32[1,8,128], index: 8, kind: output, shape index: {0}]
  %s9 = inlined_call_operand.hbm [shape: f32[2,8,128], index: 9, kind: output, shape index: {1}]
  %10 = xla_tuple %s8, %s9
  %s11 = sld [smem:[#allocation0]]
  $region74: #{tpu_custom_call.1} parent=0
    _
  %s13 = ssub.s32 1, %s11
  %s14 = scalar_select 0, %s13, %s11
  $region1: #{tpu_custom_call.1} parent=0
    #allocation2 [shape = 'u8[4096]{0}', space=vmem, size = 0x1000, scoped, tag = 'input window, operand 0, single buffered']
    #allocation3 [shape = 's32[1]{0}', space=sflag, size = 0x4, scoped, tag = 'scoped memory for tpu_custom_call.1']
    #allocation4 [shape = 's32[1]{0}', space=sflag, size = 0x4, scoped, tag = 'scoped memory for tpu_custom_call.1']
    #allocation5 [shape = 'u8[8192]{0}', space=vmem, size = 0x2000, scoped, tag = 'input window, operand 1, single buffered']
    #allocation6 [shape = 's32[1]{0}', space=sflag, size = 0x4, scoped, tag = 'scoped memory for tpu_custom_call.1']
    #allocation7 [shape = 'u8[524288]{0}', space=vmem, size = 0x80000, scoped, tag = 'input window, operand 2, single buffered']
    #allocation8 [shape = 'u8[524288]{0}', space=vmem, size = 0x80000, scoped, tag = 'input window, operand 4, single buffered']
    #allocation9 [shape = 's32[1]{0}', space=sflag, size = 0x4, scoped, tag = 'scoped memory for tpu_custom_call.1']
    #allocation10 [shape = 'u8[65536]{0}', space=vmem, size = 0x10000, scoped, tag = 'input window, operand 6, single buffered']
    #allocation11 [shape = 'u8[4096]{0}', space=vmem, size = 0x1000, scoped, tag = 'output window, operand 0, single buffered']
    #allocation12 [shape = 'u8[8192]{0}', space=vmem, size = 0x2000, scoped, tag = 'output window, operand 1, single buffered']
    #allocation13 [shape = 's32[1]{0}', space=sflag, size = 0x4, scoped, tag = 'scoped memory for tpu_custom_call.1']
    %15 = vsyncpa [#allocation3], 0
    %16 = vsyncpa [#allocation6], 0
    %17 = vsyncpa [#allocation9], 0
    %18 = vsyncpa [#allocation4], 0
    %19 = vsyncpa [#allocation13], 0
    // Predicated region
    $region2: #{tpu_custom_call.1} parent=1 // pred_check
      _
    $region3: #{tpu_custom_call.1} parent=1 // pred_check_branch
      %21 = sbr.rel (0) target = $region5
    $region4: #{tpu_custom_call.1} parent=1 // pred_region
      %s23 = ssub.s32 128, 128
      %24 = vsyncadd [#allocation3], %s23
      %s26 = sshll.u32 [#allocation2], 4
      %s27 = int_to_ptr.vmem [resolvable:$true] %s26
      %29 = dma.hbm_to_vmem [thread:$0]  %s0, 128, %s27, [#allocation3]
    $region5: #{tpu_custom_call.1} parent=1 // pred_fallthru
      _
    // Predicated region
    $region6: #{tpu_custom_call.1} parent=1 // pred_check
      _
    $region7: #{tpu_custom_call.1} parent=1 // pred_check_branch
      %31 = sbr.rel (0) target = $region9
    $region8: #{tpu_custom_call.1} parent=1 // pred_region
      %s33 = ssub.s32 256, 256
      %34 = vsyncadd [#allocation6], %s33
      %s35 = sshll.u32 [#allocation5], 4
      %s36 = int_to_ptr.vmem [resolvable:$true] %s35
      %41 = dma.hbm_to_vmem [thread:$0]  %s1, 256, %s36, [#allocation6], 128, 128, 8
    $region9: #{tpu_custom_call.1} parent=1 // pred_fallthru
      _
    // Predicated region
    $region10: #{tpu_custom_call.1} parent=1 // pred_check
      _
    $region11: #{tpu_custom_call.1} parent=1 // pred_check_branch
      %43 = sbr.rel (0) target = $region13
    $region12: #{tpu_custom_call.1} parent=1 // pred_region
      %s45 = ssub.s32 16384, 16384
      %46 = vsyncadd [#allocation6], %s45
      %s47 = sshll.u32 [#allocation7], 4
      %s48 = int_to_ptr.vmem [resolvable:$true] %s47
      %53 = dma.hbm_to_vmem [thread:$0]  %s2, 16384, %s48, [#allocation6], 512, 512, 32
    $region13: #{tpu_custom_call.1} parent=1 // pred_fallthru
      _
    // Predicated region
    $region14: #{tpu_custom_call.1} parent=1 // pred_check
      _
    $region15: #{tpu_custom_call.1} parent=1 // pred_check_branch
      %55 = sbr.rel (0) target = $region17
    $region16: #{tpu_custom_call.1} parent=1 // pred_region
      _
    $region17: #{tpu_custom_call.1} parent=1 // pred_fallthru
      _
    // Predicated region
    $region18: #{tpu_custom_call.1} parent=1 // pred_check
      _
    $region19: #{tpu_custom_call.1} parent=1 // pred_check_branch
      %57 = sbr.rel (0) target = $region21
    $region20: #{tpu_custom_call.1} parent=1 // pred_region
      %s59 = ssub.s32 16384, 16384
      %60 = vsyncadd [#allocation9], %s59
      %s61 = sshll.u32 [#allocation8], 4
      %s62 = int_to_ptr.vmem [resolvable:$true] %s61
      %67 = dma.hbm_to_vmem [thread:$0]  %s4, 16384, %s62, [#allocation9], 512, 512, 32
    $region21: #{tpu_custom_call.1} parent=1 // pred_fallthru
      _
    // Predicated region
    $region22: #{tpu_custom_call.1} parent=1 // pred_check
      _
    $region23: #{tpu_custom_call.1} parent=1 // pred_check_branch
      %69 = sbr.rel (0) target = $region25
    $region24: #{tpu_custom_call.1} parent=1 // pred_region
      _
    $region25: #{tpu_custom_call.1} parent=1 // pred_fallthru
      _
    // Predicated region
    $region26: #{tpu_custom_call.1} parent=1 // pred_check
      _
    $region27: #{tpu_custom_call.1} parent=1 // pred_check_branch
      %71 = sbr.rel (0) target = $region29
    $region28: #{tpu_custom_call.1} parent=1 // pred_region
      %s73 = ssub.s32 2048, 2048
      %74 = vsyncadd [#allocation9], %s73
      %s75 = sshll.u32 [#allocation10], 4
      %s76 = int_to_ptr.vmem [resolvable:$true] %s75
      %81 = dma.hbm_to_vmem [thread:$0]  %s6, 2048, %s76, [#allocation9], 128, 128, 8
    $region29: #{tpu_custom_call.1} parent=1 // pred_fallthru
      _
    // Predicated region
    $region30: #{tpu_custom_call.1} parent=1 // pred_check
      _
    $region31: #{tpu_custom_call.1} parent=1 // pred_check_branch
      %83 = sbr.rel (0) target = $region33
    $region32: #{tpu_custom_call.1} parent=1 // pred_region
      _
    $region33: #{tpu_custom_call.1} parent=1 // pred_fallthru
      _
    // Predicated region
    $region34: #{tpu_custom_call.1} parent=1 // pred_check
      _
    $region35: #{tpu_custom_call.1} parent=1 // pred_check_branch
      %85 = sbr.rel (0) target = $region37
    $region36: #{tpu_custom_call.1} parent=1 // pred_region
      %86 = dma.done [#allocation3], 128
    $region37: #{tpu_custom_call.1} parent=1 // pred_fallthru
      _
    // Predicated region
    $region38: #{tpu_custom_call.1} parent=1 // pred_check
      _
    $region39: #{tpu_custom_call.1} parent=1 // pred_check_branch
      %88 = sbr.rel (0) target = $region41
    $region40: #{tpu_custom_call.1} parent=1 // pred_region
      %89 = dma.done [#allocation6], 256
    $region41: #{tpu_custom_call.1} parent=1 // pred_fallthru
      _
    // Predicated region
    $region42: #{tpu_custom_call.1} parent=1 // pred_check
      _
    $region43: #{tpu_custom_call.1} parent=1 // pred_check_branch
      %91 = sbr.rel (0) target = $region45
    $region44: #{tpu_custom_call.1} parent=1 // pred_region
      %92 = dma.done [#allocation6], 16384
    $region45: #{tpu_custom_call.1} parent=1 // pred_fallthru
      _
    // Predicated region
    $region46: #{tpu_custom_call.1} parent=1 // pred_check
      _
    $region47: #{tpu_custom_call.1} parent=1 // pred_check_branch
      %94 = sbr.rel (0) target = $region49
    $region48: #{tpu_custom_call.1} parent=1 // pred_region
      %95 = dma.done [#allocation9], 16384
    $region49: #{tpu_custom_call.1} parent=1 // pred_fallthru
      _
    // Predicated region
    $region50: #{tpu_custom_call.1} parent=1 // pred_check
      _
    $region51: #{tpu_custom_call.1} parent=1 // pred_check_branch
      %97 = sbr.rel (0) target = $region53
    $region52: #{tpu_custom_call.1} parent=1 // pred_region
      %98 = dma.done [#allocation9], 2048
    $region53: #{tpu_custom_call.1} parent=1 // pred_fallthru
      _
    %p99 = scmp.eq.s32.totalorder 0, 0
    // Predicated region
    $region54: #{tpu_custom_call.1} parent=1 // pred_check
      %p100 = pneg %p99
    $region55: #{tpu_custom_call.1} parent=1 // pred_check_branch
      %102 = sbr.rel (%p100) target = $region57
    $region56: #{tpu_custom_call.1} parent=1 // pred_region
      %v103 = vld [vmem:[#allocation5] sm:$0xff]
      %v104 = vld [vmem:[#allocation5 + $0x8] sm:$0xff]
      %105 = vst [vmem:[#allocation12] sm:$0xff] %v103
      %106 = vst [vmem:[#allocation12 + $0x8] sm:$0xff] %v104
    $region57: #{tpu_custom_call.1} parent=1 // pred_fallthru
      _
    %v107 = vld [vmem:[#allocation2] sm:$0xff]
    %v108 = vld [vmem:[#allocation12] sm:$0xff]
    %s109 = scalar_lea.vmem [#allocation12], 8
    %v110 = vld [vmem:[%s109] sm:$0xff]
    %v111 = vld [vmem:[#allocation7] sm:$0xff]
    %v112 = vld [vmem:[#allocation7 + $0x8] sm:$0xff]
    %v113 = vld [vmem:[#allocation7 + $0x10] sm:$0xff]
    %v114 = vld [vmem:[#allocation7 + $0x18] sm:$0xff]
    %v115 = vld [vmem:[#allocation7 + $0x20] sm:$0xff]
    %v116 = vld [vmem:[#allocation7 + $0x28] sm:$0xff]
    %v117 = vld [vmem:[#allocation7 + $0x30] sm:$0xff]
    %v118 = vld [vmem:[#allocation7 + $0x38] sm:$0xff]
    %v119 = vld [vmem:[#allocation7 + $0x40] sm:$0xff]
    %v120 = vld [vmem:[#allocation7 + $0x48] sm:$0xff]
    %v121 = vld [vmem:[#allocation7 + $0x50] sm:$0xff]
    %v122 = vld [vmem:[#allocation7 + $0x58] sm:$0xff]
    %v123 = vld [vmem:[#allocation7 + $0x60] sm:$0xff]
    %v124 = vld [vmem:[#allocation7 + $0x68] sm:$0xff]
    %v125 = vld [vmem:[#allocation7 + $0x70] sm:$0xff]
    %v126 = vld [vmem:[#allocation7 + $0x78] sm:$0xff]
    %v127 = vld [vmem:[#allocation7 + $0x80] sm:$0xff]
    %v128 = vld [vmem:[#allocation7 + $0x88] sm:$0xff]
    %v129 = vld [vmem:[#allocation7 + $0x90] sm:$0xff]
    %v130 = vld [vmem:[#allocation7 + $0x98] sm:$0xff]
    %v131 = vld [vmem:[#allocation7 + $0xa0] sm:$0xff]
    %v132 = vld [vmem:[#allocation7 + $0xa8] sm:$0xff]
    %v133 = vld [vmem:[#allocation7 + $0xb0] sm:$0xff]
    %v134 = vld [vmem:[#allocation7 + $0xb8] sm:$0xff]
    %v135 = vld [vmem:[#allocation7 + $0xc0] sm:$0xff]
    %v136 = vld [vmem:[#allocation7 + $0xc8] sm:$0xff]
    %v137 = vld [vmem:[#allocation7 + $0xd0] sm:$0xff]
    %v138 = vld [vmem:[#allocation7 + $0xd8] sm:$0xff]
    %v139 = vld [vmem:[#allocation7 + $0xe0] sm:$0xff]
    %v140 = vld [vmem:[#allocation7 + $0xe8] sm:$0xff]
    %v141 = vld [vmem:[#allocation7 + $0xf0] sm:$0xff]
    %v142 = vld [vmem:[#allocation7 + $0xf8] sm:$0xff]
    %v143 = vld [vmem:[#allocation7 + $0x100] sm:$0xff]
    %v144 = vld [vmem:[#allocation7 + $0x108] sm:$0xff]
    %v145 = vld [vmem:[#allocation7 + $0x110] sm:$0xff]
    %v146 = vld [vmem:[#allocation7 + $0x118] sm:$0xff]
    %v147 = vld [vmem:[#allocation7 + $0x120] sm:$0xff]
    %v148 = vld [vmem:[#allocation7 + $0x128] sm:$0xff]
    %v149 = vld [vmem:[#allocation7 + $0x130] sm:$0xff]
    %v150 = vld [vmem:[#allocation7 + $0x138] sm:$0xff]
    %v151 = vld [vmem:[#allocation7 + $0x140] sm:$0xff]
    %v152 = vld [vmem:[#allocation7 + $0x148] sm:$0xff]
    %v153 = vld [vmem:[#allocation7 + $0x150] sm:$0xff]
    %v154 = vld [vmem:[#allocation7 + $0x158] sm:$0xff]
    %v155 = vld [vmem:[#allocation7 + $0x160] sm:$0xff]
    %v156 = vld [vmem:[#allocation7 + $0x168] sm:$0xff]
    %v157 = vld [vmem:[#allocation7 + $0x170] sm:$0xff]
    %v158 = vld [vmem:[#allocation7 + $0x178] sm:$0xff]
    %v159 = vld [vmem:[#allocation7 + $0x180] sm:$0xff]
    %v160 = vld [vmem:[#allocation7 + $0x188] sm:$0xff]
    %v161 = vld [vmem:[#allocation7 + $0x190] sm:$0xff]
    %v162 = vld [vmem:[#allocation7 + $0x198] sm:$0xff]
    %v163 = vld [vmem:[#allocation7 + $0x1a0] sm:$0xff]
    %v164 = vld [vmem:[#allocation7 + $0x1a8] sm:$0xff]
    %v165 = vld [vmem:[#allocation7 + $0x1b0] sm:$0xff]
    %v166 = vld [vmem:[#allocation7 + $0x1b8] sm:$0xff]
    %v167 = vld [vmem:[#allocation7 + $0x1c0] sm:$0xff]
    %v168 = vld [vmem:[#allocation7 + $0x1c8] sm:$0xff]
    %v169 = vld [vmem:[#allocation7 + $0x1d0] sm:$0xff]
    %v170 = vld [vmem:[#allocation7 + $0x1d8] sm:$0xff]
    %v171 = vld [vmem:[#allocation7 + $0x1e0] sm:$0xff]
    %v172 = vld [vmem:[#allocation7 + $0x1e8] sm:$0xff]
    %v173 = vld [vmem:[#allocation7 + $0x1f0] sm:$0xff]
    %v174 = vld [vmem:[#allocation7 + $0x1f8] sm:$0xff]
    %v175 = vld [vmem:[#allocation7 + $0x200] sm:$0xff]
    %v176 = vld [vmem:[#allocation7 + $0x208] sm:$0xff]
    %v177 = vld [vmem:[#allocation7 + $0x210] sm:$0xff]
    %v178 = vld [vmem:[#allocation7 + $0x218] sm:$0xff]
    %v179 = vld [vmem:[#allocation7 + $0x220] sm:$0xff]
    %v180 = vld [vmem:[#allocation7 + $0x228] sm:$0xff]
    %v181 = vld [vmem:[#allocation7 + $0x230] sm:$0xff]
    %v182 = vld [vmem:[#allocation7 + $0x238] sm:$0xff]
    %v183 = vld [vmem:[#allocation7 + $0x240] sm:$0xff]
    %v184 = vld [vmem:[#allocation7 + $0x248] sm:$0xff]
    %v185 = vld [vmem:[#allocation7 + $0x250] sm:$0xff]
    %v186 = vld [vmem:[#allocation7 + $0x258] sm:$0xff]
    %v187 = vld [vmem:[#allocation7 + $0x260] sm:$0xff]
    %v188 = vld [vmem:[#allocation7 + $0x268] sm:$0xff]
    %v189 = vld [vmem:[#allocation7 + $0x270] sm:$0xff]
    %v190 = vld [vmem:[#allocation7 + $0x278] sm:$0xff]
    %v191 = vld [vmem:[#allocation7 + $0x280] sm:$0xff]
    %v192 = vld [vmem:[#allocation7 + $0x288] sm:$0xff]
    %v193 = vld [vmem:[#allocation7 + $0x290] sm:$0xff]
    %v194 = vld [vmem:[#allocation7 + $0x298] sm:$0xff]
    %v195 = vld [vmem:[#allocation7 + $0x2a0] sm:$0xff]
    %v196 = vld [vmem:[#allocation7 + $0x2a8] sm:$0xff]
    %v197 = vld [vmem:[#allocation7 + $0x2b0] sm:$0xff]
    %v198 = vld [vmem:[#allocation7 + $0x2b8] sm:$0xff]
    %v199 = vld [vmem:[#allocation7 + $0x2c0] sm:$0xff]
    %v200 = vld [vmem:[#allocation7 + $0x2c8] sm:$0xff]
    %v201 = vld [vmem:[#allocation7 + $0x2d0] sm:$0xff]
    %v202 = vld [vmem:[#allocation7 + $0x2d8] sm:$0xff]
    %v203 = vld [vmem:[#allocation7 + $0x2e0] sm:$0xff]
    %v204 = vld [vmem:[#allocation7 + $0x2e8] sm:$0xff]
    %v205 = vld [vmem:[#allocation7 + $0x2f0] sm:$0xff]
    %v206 = vld [vmem:[#allocation7 + $0x2f8] sm:$0xff]
    %v207 = vld [vmem:[#allocation7 + $0x300] sm:$0xff]
    %v208 = vld [vmem:[#allocation7 + $0x308] sm:$0xff]
    %v209 = vld [vmem:[#allocation7 + $0x310] sm:$0xff]
    %v210 = vld [vmem:[#allocation7 + $0x318] sm:$0xff]
    %v211 = vld [vmem:[#allocation7 + $0x320] sm:$0xff]
    %v212 = vld [vmem:[#allocation7 + $0x328] sm:$0xff]
    %v213 = vld [vmem:[#allocation7 + $0x330] sm:$0xff]
    %v214 = vld [vmem:[#allocation7 + $0x338] sm:$0xff]
    %v215 = vld [vmem:[#allocation7 + $0x340] sm:$0xff]
    %v216 = vld [vmem:[#allocation7 + $0x348] sm:$0xff]
    %v217 = vld [vmem:[#allocation7 + $0x350] sm:$0xff]
    %v218 = vld [vmem:[#allocation7 + $0x358] sm:$0xff]
    %v219 = vld [vmem:[#allocation7 + $0x360] sm:$0xff]
    %v220 = vld [vmem:[#allocation7 + $0x368] sm:$0xff]
    %v221 = vld [vmem:[#allocation7 + $0x370] sm:$0xff]
    %v222 = vld [vmem:[#allocation7 + $0x378] sm:$0xff]
    %v223 = vld [vmem:[#allocation7 + $0x380] sm:$0xff]
    %v224 = vld [vmem:[#allocation7 + $0x388] sm:$0xff]
    %v225 = vld [vmem:[#allocation7 + $0x390] sm:$0xff]
    %v226 = vld [vmem:[#allocation7 + $0x398] sm:$0xff]
    %v227 = vld [vmem:[#allocation7 + $0x3a0] sm:$0xff]
    %v228 = vld [vmem:[#allocation7 + $0x3a8] sm:$0xff]
    %v229 = vld [vmem:[#allocation7 + $0x3b0] sm:$0xff]
    %v230 = vld [vmem:[#allocation7 + $0x3b8] sm:$0xff]
    %v231 = vld [vmem:[#allocation7 + $0x3c0] sm:$0xff]
    %v232 = vld [vmem:[#allocation7 + $0x3c8] sm:$0xff]
    %v233 = vld [vmem:[#allocation7 + $0x3d0] sm:$0xff]
    %v234 = vld [vmem:[#allocation7 + $0x3d8] sm:$0xff]
    %v235 = vld [vmem:[#allocation7 + $0x3e0] sm:$0xff]
    %v236 = vld [vmem:[#allocation7 + $0x3e8] sm:$0xff]
    %v237 = vld [vmem:[#allocation7 + $0x3f0] sm:$0xff]
    %v238 = vld [vmem:[#allocation7 + $0x3f8] sm:$0xff]
    %v239 = vld [vmem:[%s3] sm:$0xf]
    %v241 = vlaneseq
    %v242 = vshrl.u32 %v241, 7
    %v243 = vsub.s32 0, %v242
    %v244 = vrot.slane %v239, %v243
    %v245 = vlaneseq
    %v246 = vshrl.u32 %v245, 7
    %v247 = vsub.s32 1, %v246
    %v248 = vrot.slane %v239, %v247
    %v249 = vlaneseq
    %v250 = vshrl.u32 %v249, 7
    %v251 = vsub.s32 2, %v250
    %v252 = vrot.slane %v239, %v251
    %v253 = vlaneseq
    %v254 = vshrl.u32 %v253, 7
    %v255 = vsub.s32 3, %v254
    %v256 = vrot.slane %v239, %v255
    %261 = vmatprep.subr.mxu0 %v112
    %262 = vmatpush1.msra.mxu0 %v111
    %263 = vmatprep.subr.mxu0 %v116
    %264 = vmatpush1.msra.mxu0 %v115
    %265 = vmatprep.subr.mxu0 %v120
    %266 = vmatpush1.msra.mxu0 %v119
    %267 = vmatprep.subr.mxu0 %v124
    %268 = vmatpush1.msra.mxu0 %v123
    %269 = vmatprep.subr.mxu0 %v128
    %270 = vmatpush1.msra.mxu0 %v127
    %271 = vmatprep.subr.mxu0 %v132
    %272 = vmatpush1.msra.mxu0 %v131
    %273 = vmatprep.subr.mxu0 %v136
    %274 = vmatpush1.msra.mxu0 %v135
    %275 = vmatprep.subr.mxu0 %v140
    %276 = vmatpush1.msra.mxu0 %v139
    %277 = vmatprep.subr.mxu0 %v144
    %278 = vmatpush1.msra.mxu0 %v143
    %279 = vmatprep.subr.mxu0 %v148
    %280 = vmatpush1.msra.mxu0 %v147
    %281 = vmatprep.subr.mxu0 %v152
    %282 = vmatpush1.msra.mxu0 %v151
    %283 = vmatprep.subr.mxu0 %v156
    %284 = vmatpush1.msra.mxu0 %v155
    %285 = vmatprep.subr.mxu0 %v160
    %286 = vmatpush1.msra.mxu0 %v159
    %287 = vmatprep.subr.mxu0 %v164
    %288 = vmatpush1.msra.mxu0 %v163
    %289 = vmatprep.subr.mxu0 %v168
    %290 = vmatpush1.msra.mxu0 %v167
    %291 = vmatprep.subr.mxu0 %v172
    %292 = vmatpush1.msra.mxu0 %v171
    %293 = vmatprep.subr.mxu0 %v176
    %294 = vmatpush1.msra.mxu0 %v175
    %295 = vmatprep.subr.mxu0 %v180
    %296 = vmatpush1.msra.mxu0 %v179
    %297 = vmatprep.subr.mxu0 %v184
    %298 = vmatpush1.msra.mxu0 %v183
    %299 = vmatprep.subr.mxu0 %v188
    %300 = vmatpush1.msra.mxu0 %v187
    %301 = vmatprep.subr.mxu0 %v192
    %302 = vmatpush1.msra.mxu0 %v191
    %303 = vmatprep.subr.mxu0 %v196
    %304 = vmatpush1.msra.mxu0 %v195
    %305 = vmatprep.subr.mxu0 %v200
    %306 = vmatpush1.msra.mxu0 %v199
    %307 = vmatprep.subr.mxu0 %v204
    %308 = vmatpush1.msra.mxu0 %v203
    %309 = vmatprep.subr.mxu0 %v208
    %310 = vmatpush1.msra.mxu0 %v207
    %311 = vmatprep.subr.mxu0 %v212
    %312 = vmatpush1.msra.mxu0 %v211
    %313 = vmatprep.subr.mxu0 %v216
    %314 = vmatpush1.msra.mxu0 %v215
    %315 = vmatprep.subr.mxu0 %v220
    %316 = vmatpush1.msra.mxu0 %v219
    %317 = vmatprep.subr.mxu0 %v224
    %318 = vmatpush1.msra.mxu0 %v223
    %319 = vmatprep.subr.mxu0 %v228
    %320 = vmatpush1.msra.mxu0 %v227
    %321 = vmatprep.subr.mxu0 %v232
    %322 = vmatpush1.msra.mxu0 %v231
    %323 = vmatprep.subr.mxu0 %v236
    %324 = vmatpush1.msra.mxu0 %v235
    %325 = vmatprep.mubr.f32.mxu0 %v108
    %326 = vmatmul.mubr.f32.gmra.mrb[0].mxu0 %v107
    %v327 = vpop.f32.mrb[0].mxu0
    %v328 = vadd.f32 %v244, %v327
    %v329 = vpop.f32.mrb[0].mxu0
    %v330 = vadd.f32 %v248, %v329
    %331 = vdwg.mxu0
    %332 = vmatprep.subr.mxu0 %v114
    %333 = vmatpush1.msra.mxu0 %v113
    %334 = vmatprep.subr.mxu0 %v118
    %335 = vmatpush1.msra.mxu0 %v117
    %336 = vmatprep.subr.mxu0 %v122
    %337 = vmatpush1.msra.mxu0 %v121
    %338 = vmatprep.subr.mxu0 %v126
    %339 = vmatpush1.msra.mxu0 %v125
    %340 = vmatprep.subr.mxu0 %v130
    %341 = vmatpush1.msra.mxu0 %v129
    %342 = vmatprep.subr.mxu0 %v134
    %343 = vmatpush1.msra.mxu0 %v133
    %344 = vmatprep.subr.mxu0 %v138
    %345 = vmatpush1.msra.mxu0 %v137
    %346 = vmatprep.subr.mxu0 %v142
    %347 = vmatpush1.msra.mxu0 %v141
    %348 = vmatprep.subr.mxu0 %v146
    %349 = vmatpush1.msra.mxu0 %v145
    %350 = vmatprep.subr.mxu0 %v150
    %351 = vmatpush1.msra.mxu0 %v149
    %352 = vmatprep.subr.mxu0 %v154
    %353 = vmatpush1.msra.mxu0 %v153
    %354 = vmatprep.subr.mxu0 %v158
    %355 = vmatpush1.msra.mxu0 %v157
    %356 = vmatprep.subr.mxu0 %v162
    %357 = vmatpush1.msra.mxu0 %v161
    %358 = vmatprep.subr.mxu0 %v166
    %359 = vmatpush1.msra.mxu0 %v165
    %360 = vmatprep.subr.mxu0 %v170
    %361 = vmatpush1.msra.mxu0 %v169
    %362 = vmatprep.subr.mxu0 %v174
    %363 = vmatpush1.msra.mxu0 %v173
    %364 = vmatprep.subr.mxu0 %v178
    %365 = vmatpush1.msra.mxu0 %v177
    %366 = vmatprep.subr.mxu0 %v182
    %367 = vmatpush1.msra.mxu0 %v181
    %368 = vmatprep.subr.mxu0 %v186
    %369 = vmatpush1.msra.mxu0 %v185
    %370 = vmatprep.subr.mxu0 %v190
    %371 = vmatpush1.msra.mxu0 %v189
    %372 = vmatprep.subr.mxu0 %v194
    %373 = vmatpush1.msra.mxu0 %v193
    %374 = vmatprep.subr.mxu0 %v198
    %375 = vmatpush1.msra.mxu0 %v197
    %376 = vmatprep.subr.mxu0 %v202
    %377 = vmatpush1.msra.mxu0 %v201
    %378 = vmatprep.subr.mxu0 %v206
    %379 = vmatpush1.msra.mxu0 %v205
    %380 = vmatprep.subr.mxu0 %v210
    %381 = vmatpush1.msra.mxu0 %v209
    %382 = vmatprep.subr.mxu0 %v214
    %383 = vmatpush1.msra.mxu0 %v213
    %384 = vmatprep.subr.mxu0 %v218
    %385 = vmatpush1.msra.mxu0 %v217
    %386 = vmatprep.subr.mxu0 %v222
    %387 = vmatpush1.msra.mxu0 %v221
    %388 = vmatprep.subr.mxu0 %v226
    %389 = vmatpush1.msra.mxu0 %v225
    %390 = vmatprep.subr.mxu0 %v230
    %391 = vmatpush1.msra.mxu0 %v229
    %392 = vmatprep.subr.mxu0 %v234
    %393 = vmatpush1.msra.mxu0 %v233
    %394 = vmatprep.subr.mxu0 %v238
    %395 = vmatpush1.msra.mxu0 %v237
    %396 = vmatprep.mubr.f32.mxu0 %v108
    %397 = vmatmul.mubr.f32.gmra.mrb[0].mxu0 %v107
    %v398 = vpop.f32.mrb[0].mxu0
    %v399 = vadd.f32 %v252, %v398
    %v400 = vpop.f32.mrb[0].mxu0
    %v401 = vadd.f32 %v256, %v400
    %402 = vdwg.mxu0
    %v403 = vxor.u32 %v328, 2147483648
    %v404 = vmul.f32 %v403, 1.442695
    %v405 = vpow.pop %v404
    %v406 = vadd.f32 %v405, 1.0
    %v407 = vrcp.pop %v406
    %v408 = vmul.f32 1.0, %v407
    %v409 = vxor.u32 %v330, 2147483648
    %v410 = vmul.f32 %v409, 1.442695
    %v411 = vpow.pop %v410
    %v412 = vadd.f32 %v411, 1.0
    %v413 = vrcp.pop %v412
    %v414 = vmul.f32 1.0, %v413
    %v415 = vmul.f32 %v408, %v401
    %v416 = vadd.f32 %v399, %v415
    %v417 = vtanh.pop %v416
    %v418 = vsub.f32 1.0, %v414
    %v419 = vmul.f32 %v418, %v417
    %v420 = vmul.f32 %v414, %v108
    %v421 = vadd.f32 %v419, %v420
    %v422 = vld [vmem:[#allocation8] sm:$0xff]
    %v423 = vld [vmem:[#allocation8 + $0x8] sm:$0xff]
    %v424 = vld [vmem:[#allocation8 + $0x10] sm:$0xff]
    %v425 = vld [vmem:[#allocation8 + $0x18] sm:$0xff]
    %v426 = vld [vmem:[#allocation8 + $0x20] sm:$0xff]
    %v427 = vld [vmem:[#allocation8 + $0x28] sm:$0xff]
    %v428 = vld [vmem:[#allocation8 + $0x30] sm:$0xff]
    %v429 = vld [vmem:[#allocation8 + $0x38] sm:$0xff]
    %v430 = vld [vmem:[#allocation8 + $0x40] sm:$0xff]
    %v431 = vld [vmem:[#allocation8 + $0x48] sm:$0xff]
    %v432 = vld [vmem:[#allocation8 + $0x50] sm:$0xff]
    %v433 = vld [vmem:[#allocation8 + $0x58] sm:$0xff]
    %v434 = vld [vmem:[#allocation8 + $0x60] sm:$0xff]
    %v435 = vld [vmem:[#allocation8 + $0x68] sm:$0xff]
    %v436 = vld [vmem:[#allocation8 + $0x70] sm:$0xff]
    %v437 = vld [vmem:[#allocation8 + $0x78] sm:$0xff]
    %v438 = vld [vmem:[#allocation8 + $0x80] sm:$0xff]
    %v439 = vld [vmem:[#allocation8 + $0x88] sm:$0xff]
    %v440 = vld [vmem:[#allocation8 + $0x90] sm:$0xff]
    %v441 = vld [vmem:[#allocation8 + $0x98] sm:$0xff]
    %v442 = vld [vmem:[#allocation8 + $0xa0] sm:$0xff]
    %v443 = vld [vmem:[#allocation8 + $0xa8] sm:$0xff]
    %v444 = vld [vmem:[#allocation8 + $0xb0] sm:$0xff]
    %v445 = vld [vmem:[#allocation8 + $0xb8] sm:$0xff]
    %v446 = vld [vmem:[#allocation8 + $0xc0] sm:$0xff]
    %v447 = vld [vmem:[#allocation8 + $0xc8] sm:$0xff]
    %v448 = vld [vmem:[#allocation8 + $0xd0] sm:$0xff]
    %v449 = vld [vmem:[#allocation8 + $0xd8] sm:$0xff]
    %v450 = vld [vmem:[#allocation8 + $0xe0] sm:$0xff]
    %v451 = vld [vmem:[#allocation8 + $0xe8] sm:$0xff]
    %v452 = vld [vmem:[#allocation8 + $0xf0] sm:$0xff]
    %v453 = vld [vmem:[#allocation8 + $0xf8] sm:$0xff]
    %v454 = vld [vmem:[#allocation8 + $0x100] sm:$0xff]
    %v455 = vld [vmem:[#allocation8 + $0x108] sm:$0xff]
    %v456 = vld [vmem:[#allocation8 + $0x110] sm:$0xff]
    %v457 = vld [vmem:[#allocation8 + $0x118] sm:$0xff]
    %v458 = vld [vmem:[#allocation8 + $0x120] sm:$0xff]
    %v459 = vld [vmem:[#allocation8 + $0x128] sm:$0xff]
    %v460 = vld [vmem:[#allocation8 + $0x130] sm:$0xff]
    %v461 = vld [vmem:[#allocation8 + $0x138] sm:$0xff]
    %v462 = vld [vmem:[#allocation8 + $0x140] sm:$0xff]
    %v463 = vld [vmem:[#allocation8 + $0x148] sm:$0xff]
    %v464 = vld [vmem:[#allocation8 + $0x150] sm:$0xff]
    %v465 = vld [vmem:[#allocation8 + $0x158] sm:$0xff]
    %v466 = vld [vmem:[#allocation8 + $0x160] sm:$0xff]
    %v467 = vld [vmem:[#allocation8 + $0x168] sm:$0xff]
    %v468 = vld [vmem:[#allocation8 + $0x170] sm:$0xff]
    %v469 = vld [vmem:[#allocation8 + $0x178] sm:$0xff]
    %v470 = vld [vmem:[#allocation8 + $0x180] sm:$0xff]
    %v471 = vld [vmem:[#allocation8 + $0x188] sm:$0xff]
    %v472 = vld [vmem:[#allocation8 + $0x190] sm:$0xff]
    %v473 = vld [vmem:[#allocation8 + $0x198] sm:$0xff]
    %v474 = vld [vmem:[#allocation8 + $0x1a0] sm:$0xff]
    %v475 = vld [vmem:[#allocation8 + $0x1a8] sm:$0xff]
    %v476 = vld [vmem:[#allocation8 + $0x1b0] sm:$0xff]
    %v477 = vld [vmem:[#allocation8 + $0x1b8] sm:$0xff]
    %v478 = vld [vmem:[#allocation8 + $0x1c0] sm:$0xff]
    %v479 = vld [vmem:[#allocation8 + $0x1c8] sm:$0xff]
    %v480 = vld [vmem:[#allocation8 + $0x1d0] sm:$0xff]
    %v481 = vld [vmem:[#allocation8 + $0x1d8] sm:$0xff]
    %v482 = vld [vmem:[#allocation8 + $0x1e0] sm:$0xff]
    %v483 = vld [vmem:[#allocation8 + $0x1e8] sm:$0xff]
    %v484 = vld [vmem:[#allocation8 + $0x1f0] sm:$0xff]
    %v485 = vld [vmem:[#allocation8 + $0x1f8] sm:$0xff]
    %v486 = vld [vmem:[#allocation8 + $0x200] sm:$0xff]
    %v487 = vld [vmem:[#allocation8 + $0x208] sm:$0xff]
    %v488 = vld [vmem:[#allocation8 + $0x210] sm:$0xff]
    %v489 = vld [vmem:[#allocation8 + $0x218] sm:$0xff]
    %v490 = vld [vmem:[#allocation8 + $0x220] sm:$0xff]
    %v491 = vld [vmem:[#allocation8 + $0x228] sm:$0xff]
    %v492 = vld [vmem:[#allocation8 + $0x230] sm:$0xff]
    %v493 = vld [vmem:[#allocation8 + $0x238] sm:$0xff]
    %v494 = vld [vmem:[#allocation8 + $0x240] sm:$0xff]
    %v495 = vld [vmem:[#allocation8 + $0x248] sm:$0xff]
    %v496 = vld [vmem:[#allocation8 + $0x250] sm:$0xff]
    %v497 = vld [vmem:[#allocation8 + $0x258] sm:$0xff]
    %v498 = vld [vmem:[#allocation8 + $0x260] sm:$0xff]
    %v499 = vld [vmem:[#allocation8 + $0x268] sm:$0xff]
    %v500 = vld [vmem:[#allocation8 + $0x270] sm:$0xff]
    %v501 = vld [vmem:[#allocation8 + $0x278] sm:$0xff]
    %v502 = vld [vmem:[#allocation8 + $0x280] sm:$0xff]
    %v503 = vld [vmem:[#allocation8 + $0x288] sm:$0xff]
    %v504 = vld [vmem:[#allocation8 + $0x290] sm:$0xff]
    %v505 = vld [vmem:[#allocation8 + $0x298] sm:$0xff]
    %v506 = vld [vmem:[#allocation8 + $0x2a0] sm:$0xff]
    %v507 = vld [vmem:[#allocation8 + $0x2a8] sm:$0xff]
    %v508 = vld [vmem:[#allocation8 + $0x2b0] sm:$0xff]
    %v509 = vld [vmem:[#allocation8 + $0x2b8] sm:$0xff]
    %v510 = vld [vmem:[#allocation8 + $0x2c0] sm:$0xff]
    %v511 = vld [vmem:[#allocation8 + $0x2c8] sm:$0xff]
    %v512 = vld [vmem:[#allocation8 + $0x2d0] sm:$0xff]
    %v513 = vld [vmem:[#allocation8 + $0x2d8] sm:$0xff]
    %v514 = vld [vmem:[#allocation8 + $0x2e0] sm:$0xff]
    %v515 = vld [vmem:[#allocation8 + $0x2e8] sm:$0xff]
    %v516 = vld [vmem:[#allocation8 + $0x2f0] sm:$0xff]
    %v517 = vld [vmem:[#allocation8 + $0x2f8] sm:$0xff]
    %v518 = vld [vmem:[#allocation8 + $0x300] sm:$0xff]
    %v519 = vld [vmem:[#allocation8 + $0x308] sm:$0xff]
    %v520 = vld [vmem:[#allocation8 + $0x310] sm:$0xff]
    %v521 = vld [vmem:[#allocation8 + $0x318] sm:$0xff]
    %v522 = vld [vmem:[#allocation8 + $0x320] sm:$0xff]
    %v523 = vld [vmem:[#allocation8 + $0x328] sm:$0xff]
    %v524 = vld [vmem:[#allocation8 + $0x330] sm:$0xff]
    %v525 = vld [vmem:[#allocation8 + $0x338] sm:$0xff]
    %v526 = vld [vmem:[#allocation8 + $0x340] sm:$0xff]
    %v527 = vld [vmem:[#allocation8 + $0x348] sm:$0xff]
    %v528 = vld [vmem:[#allocation8 + $0x350] sm:$0xff]
    %v529 = vld [vmem:[#allocation8 + $0x358] sm:$0xff]
    %v530 = vld [vmem:[#allocation8 + $0x360] sm:$0xff]
    %v531 = vld [vmem:[#allocation8 + $0x368] sm:$0xff]
    %v532 = vld [vmem:[#allocation8 + $0x370] sm:$0xff]
    %v533 = vld [vmem:[#allocation8 + $0x378] sm:$0xff]
    %v534 = vld [vmem:[#allocation8 + $0x380] sm:$0xff]
    %v535 = vld [vmem:[#allocation8 + $0x388] sm:$0xff]
    %v536 = vld [vmem:[#allocation8 + $0x390] sm:$0xff]
    %v537 = vld [vmem:[#allocation8 + $0x398] sm:$0xff]
    %v538 = vld [vmem:[#allocation8 + $0x3a0] sm:$0xff]
    %v539 = vld [vmem:[#allocation8 + $0x3a8] sm:$0xff]
    %v540 = vld [vmem:[#allocation8 + $0x3b0] sm:$0xff]
    %v541 = vld [vmem:[#allocation8 + $0x3b8] sm:$0xff]
    %v542 = vld [vmem:[#allocation8 + $0x3c0] sm:$0xff]
    %v543 = vld [vmem:[#allocation8 + $0x3c8] sm:$0xff]
    %v544 = vld [vmem:[#allocation8 + $0x3d0] sm:$0xff]
    %v545 = vld [vmem:[#allocation8 + $0x3d8] sm:$0xff]
    %v546 = vld [vmem:[#allocation8 + $0x3e0] sm:$0xff]
    %v547 = vld [vmem:[#allocation8 + $0x3e8] sm:$0xff]
    %v548 = vld [vmem:[#allocation8 + $0x3f0] sm:$0xff]
    %v549 = vld [vmem:[#allocation8 + $0x3f8] sm:$0xff]
    %v550 = vld [vmem:[%s5] sm:$0xf]
    %v552 = vlaneseq
    %v553 = vshrl.u32 %v552, 7
    %v554 = vsub.s32 0, %v553
    %v555 = vrot.slane %v550, %v554
    %v556 = vlaneseq
    %v557 = vshrl.u32 %v556, 7
    %v558 = vsub.s32 1, %v557
    %v559 = vrot.slane %v550, %v558
    %v560 = vlaneseq
    %v561 = vshrl.u32 %v560, 7
    %v562 = vsub.s32 2, %v561
    %v563 = vrot.slane %v550, %v562
    %v564 = vlaneseq
    %v565 = vshrl.u32 %v564, 7
    %v566 = vsub.s32 3, %v565
    %v567 = vrot.slane %v550, %v566
    %572 = vmatprep.subr.mxu0 %v423
    %573 = vmatpush1.msra.mxu0 %v422
    %574 = vmatprep.subr.mxu0 %v427
    %575 = vmatpush1.msra.mxu0 %v426
    %576 = vmatprep.subr.mxu0 %v431
    %577 = vmatpush1.msra.mxu0 %v430
    %578 = vmatprep.subr.mxu0 %v435
    %579 = vmatpush1.msra.mxu0 %v434
    %580 = vmatprep.subr.mxu0 %v439
    %581 = vmatpush1.msra.mxu0 %v438
    %582 = vmatprep.subr.mxu0 %v443
    %583 = vmatpush1.msra.mxu0 %v442
    %584 = vmatprep.subr.mxu0 %v447
    %585 = vmatpush1.msra.mxu0 %v446
    %586 = vmatprep.subr.mxu0 %v451
    %587 = vmatpush1.msra.mxu0 %v450
    %588 = vmatprep.subr.mxu0 %v455
    %589 = vmatpush1.msra.mxu0 %v454
    %590 = vmatprep.subr.mxu0 %v459
    %591 = vmatpush1.msra.mxu0 %v458
    %592 = vmatprep.subr.mxu0 %v463
    %593 = vmatpush1.msra.mxu0 %v462
    %594 = vmatprep.subr.mxu0 %v467
    %595 = vmatpush1.msra.mxu0 %v466
    %596 = vmatprep.subr.mxu0 %v471
    %597 = vmatpush1.msra.mxu0 %v470
    %598 = vmatprep.subr.mxu0 %v475
    %599 = vmatpush1.msra.mxu0 %v474
    %600 = vmatprep.subr.mxu0 %v479
    %601 = vmatpush1.msra.mxu0 %v478
    %602 = vmatprep.subr.mxu0 %v483
    %603 = vmatpush1.msra.mxu0 %v482
    %604 = vmatprep.subr.mxu0 %v487
    %605 = vmatpush1.msra.mxu0 %v486
    %606 = vmatprep.subr.mxu0 %v491
    %607 = vmatpush1.msra.mxu0 %v490
    %608 = vmatprep.subr.mxu0 %v495
    %609 = vmatpush1.msra.mxu0 %v494
    %610 = vmatprep.subr.mxu0 %v499
    %611 = vmatpush1.msra.mxu0 %v498
    %612 = vmatprep.subr.mxu0 %v503
    %613 = vmatpush1.msra.mxu0 %v502
    %614 = vmatprep.subr.mxu0 %v507
    %615 = vmatpush1.msra.mxu0 %v506
    %616 = vmatprep.subr.mxu0 %v511
    %617 = vmatpush1.msra.mxu0 %v510
    %618 = vmatprep.subr.mxu0 %v515
    %619 = vmatpush1.msra.mxu0 %v514
    %620 = vmatprep.subr.mxu0 %v519
    %621 = vmatpush1.msra.mxu0 %v518
    %622 = vmatprep.subr.mxu0 %v523
    %623 = vmatpush1.msra.mxu0 %v522
    %624 = vmatprep.subr.mxu0 %v527
    %625 = vmatpush1.msra.mxu0 %v526
    %626 = vmatprep.subr.mxu0 %v531
    %627 = vmatpush1.msra.mxu0 %v530
    %628 = vmatprep.subr.mxu0 %v535
    %629 = vmatpush1.msra.mxu0 %v534
    %630 = vmatprep.subr.mxu0 %v539
    %631 = vmatpush1.msra.mxu0 %v538
    %632 = vmatprep.subr.mxu0 %v543
    %633 = vmatpush1.msra.mxu0 %v542
    %634 = vmatprep.subr.mxu0 %v547
    %635 = vmatpush1.msra.mxu0 %v546
    %636 = vmatprep.mubr.f32.mxu0 %v110
    %637 = vmatmul.mubr.f32.gmra.mrb[0].mxu0 %v421
    %v638 = vpop.f32.mrb[0].mxu0
    %v639 = vadd.f32 %v555, %v638
    %v640 = vpop.f32.mrb[0].mxu0
    %v641 = vadd.f32 %v559, %v640
    %642 = vdwg.mxu0
    %643 = vmatprep.subr.mxu0 %v425
    %644 = vmatpush1.msra.mxu0 %v424
    %645 = vmatprep.subr.mxu0 %v429
    %646 = vmatpush1.msra.mxu0 %v428
    %647 = vmatprep.subr.mxu0 %v433
    %648 = vmatpush1.msra.mxu0 %v432
    %649 = vmatprep.subr.mxu0 %v437
    %650 = vmatpush1.msra.mxu0 %v436
    %651 = vmatprep.subr.mxu0 %v441
    %652 = vmatpush1.msra.mxu0 %v440
    %653 = vmatprep.subr.mxu0 %v445
    %654 = vmatpush1.msra.mxu0 %v444
    %655 = vmatprep.subr.mxu0 %v449
    %656 = vmatpush1.msra.mxu0 %v448
    %657 = vmatprep.subr.mxu0 %v453
    %658 = vmatpush1.msra.mxu0 %v452
    %659 = vmatprep.subr.mxu0 %v457
    %660 = vmatpush1.msra.mxu0 %v456
    %661 = vmatprep.subr.mxu0 %v461
    %662 = vmatpush1.msra.mxu0 %v460
    %663 = vmatprep.subr.mxu0 %v465
    %664 = vmatpush1.msra.mxu0 %v464
    %665 = vmatprep.subr.mxu0 %v469
    %666 = vmatpush1.msra.mxu0 %v468
    %667 = vmatprep.subr.mxu0 %v473
    %668 = vmatpush1.msra.mxu0 %v472
    %669 = vmatprep.subr.mxu0 %v477
    %670 = vmatpush1.msra.mxu0 %v476
    %671 = vmatprep.subr.mxu0 %v481
    %672 = vmatpush1.msra.mxu0 %v480
    %673 = vmatprep.subr.mxu0 %v485
    %674 = vmatpush1.msra.mxu0 %v484
    %675 = vmatprep.subr.mxu0 %v489
    %676 = vmatpush1.msra.mxu0 %v488
    %677 = vmatprep.subr.mxu0 %v493
    %678 = vmatpush1.msra.mxu0 %v492
    %679 = vmatprep.subr.mxu0 %v497
    %680 = vmatpush1.msra.mxu0 %v496
    %681 = vmatprep.subr.mxu0 %v501
    %682 = vmatpush1.msra.mxu0 %v500
    %683 = vmatprep.subr.mxu0 %v505
    %684 = vmatpush1.msra.mxu0 %v504
    %685 = vmatprep.subr.mxu0 %v509
    %686 = vmatpush1.msra.mxu0 %v508
    %687 = vmatprep.subr.mxu0 %v513
    %688 = vmatpush1.msra.mxu0 %v512
    %689 = vmatprep.subr.mxu0 %v517
    %690 = vmatpush1.msra.mxu0 %v516
    %691 = vmatprep.subr.mxu0 %v521
    %692 = vmatpush1.msra.mxu0 %v520
    %693 = vmatprep.subr.mxu0 %v525
    %694 = vmatpush1.msra.mxu0 %v524
    %695 = vmatprep.subr.mxu0 %v529
    %696 = vmatpush1.msra.mxu0 %v528
    %697 = vmatprep.subr.mxu0 %v533
    %698 = vmatpush1.msra.mxu0 %v532
    %699 = vmatprep.subr.mxu0 %v537
    %700 = vmatpush1.msra.mxu0 %v536
    %701 = vmatprep.subr.mxu0 %v541
    %702 = vmatpush1.msra.mxu0 %v540
    %703 = vmatprep.subr.mxu0 %v545
    %704 = vmatpush1.msra.mxu0 %v544
    %705 = vmatprep.subr.mxu0 %v549
    %706 = vmatpush1.msra.mxu0 %v548
    %707 = vmatprep.mubr.f32.mxu0 %v110
    %708 = vmatmul.mubr.f32.gmra.mrb[0].mxu0 %v421
    %v709 = vpop.f32.mrb[0].mxu0
    %v710 = vadd.f32 %v563, %v709
    %v711 = vpop.f32.mrb[0].mxu0
    %v712 = vadd.f32 %v567, %v711
    %713 = vdwg.mxu0
    %v714 = vxor.u32 %v639, 2147483648
    %v715 = vmul.f32 %v714, 1.442695
    %v716 = vpow.pop %v715
    %v717 = vadd.f32 %v716, 1.0
    %v718 = vrcp.pop %v717
    %v719 = vmul.f32 1.0, %v718
    %v720 = vxor.u32 %v641, 2147483648
    %v721 = vmul.f32 %v720, 1.442695
    %v722 = vpow.pop %v721
    %v723 = vadd.f32 %v722, 1.0
    %v724 = vrcp.pop %v723
    %v725 = vmul.f32 1.0, %v724
    %v726 = vmul.f32 %v719, %v712
    %v727 = vadd.f32 %v710, %v726
    %v728 = vtanh.pop %v727
    %v729 = vsub.f32 1.0, %v725
    %v730 = vmul.f32 %v729, %v728
    %v731 = vmul.f32 %v725, %v110
    %v732 = vadd.f32 %v730, %v731
    %733 = vst [vmem:[#allocation12] sm:$0xff] %v421
    %734 = vst [vmem:[%s109] sm:$0xff] %v732
    %v735 = vld [vmem:[#allocation10] sm:$0xff]
    %v736 = vld [vmem:[#allocation10 + $0x8] sm:$0xff]
    %v737 = vld [vmem:[#allocation10 + $0x10] sm:$0xff]
    %v738 = vld [vmem:[#allocation10 + $0x18] sm:$0xff]
    %v739 = vld [vmem:[#allocation10 + $0x20] sm:$0xff]
    %v740 = vld [vmem:[#allocation10 + $0x28] sm:$0xff]
    %v741 = vld [vmem:[#allocation10 + $0x30] sm:$0xff]
    %v742 = vld [vmem:[#allocation10 + $0x38] sm:$0xff]
    %v743 = vld [vmem:[#allocation10 + $0x40] sm:$0xff]
    %v744 = vld [vmem:[#allocation10 + $0x48] sm:$0xff]
    %v745 = vld [vmem:[#allocation10 + $0x50] sm:$0xff]
    %v746 = vld [vmem:[#allocation10 + $0x58] sm:$0xff]
    %v747 = vld [vmem:[#allocation10 + $0x60] sm:$0xff]
    %v748 = vld [vmem:[#allocation10 + $0x68] sm:$0xff]
    %v749 = vld [vmem:[#allocation10 + $0x70] sm:$0xff]
    %v750 = vld [vmem:[#allocation10 + $0x78] sm:$0xff]
    %v751 = vld [vmem:[%s7] sm:$0x1]
    %v753 = vlaneseq
    %v754 = vshrl.u32 %v753, 7
    %v755 = vsub.s32 0, %v754
    %v756 = vrot.slane %v751, %v755
    %758 = vmatprep.subr.mxu0 0.0
    %759 = vmatpush1.msra.mxu0 %v735
    %760 = vmatprep.subr.mxu0 0.0
    %761 = vmatpush1.msra.mxu0 %v736
    %762 = vmatprep.subr.mxu0 0.0
    %763 = vmatpush1.msra.mxu0 %v737
    %764 = vmatprep.subr.mxu0 0.0
    %765 = vmatpush1.msra.mxu0 %v738
    %766 = vmatprep.subr.mxu0 0.0
    %767 = vmatpush1.msra.mxu0 %v739
    %768 = vmatprep.subr.mxu0 0.0
    %769 = vmatpush1.msra.mxu0 %v740
    %770 = vmatprep.subr.mxu0 0.0
    %771 = vmatpush1.msra.mxu0 %v741
    %772 = vmatprep.subr.mxu0 0.0
    %773 = vmatpush1.msra.mxu0 %v742
    %774 = vmatprep.subr.mxu0 0.0
    %775 = vmatpush1.msra.mxu0 %v743
    %776 = vmatprep.subr.mxu0 0.0
    %777 = vmatpush1.msra.mxu0 %v744
    %778 = vmatprep.subr.mxu0 0.0
    %779 = vmatpush1.msra.mxu0 %v745
    %780 = vmatprep.subr.mxu0 0.0
    %781 = vmatpush1.msra.mxu0 %v746
    %782 = vmatprep.subr.mxu0 0.0
    %783 = vmatpush1.msra.mxu0 %v747
    %784 = vmatprep.subr.mxu0 0.0
    %785 = vmatpush1.msra.mxu0 %v748
    %786 = vmatprep.subr.mxu0 0.0
    %787 = vmatpush1.msra.mxu0 %v749
    %788 = vmatprep.subr.mxu0 0.0
    %789 = vmatpush1.msra.mxu0 %v750
    %790 = vmatprep.subr.mxu0 0.0
    %791 = vmatpush1.msra.mxu0 0.0
    %792 = vmatprep.subr.mxu0 0.0
    %793 = vmatpush1.msra.mxu0 0.0
    %794 = vmatprep.subr.mxu0 0.0
    %795 = vmatpush1.msra.mxu0 0.0
    %796 = vmatprep.subr.mxu0 0.0
    %797 = vmatpush1.msra.mxu0 0.0
    %798 = vmatprep.subr.mxu0 0.0
    %799 = vmatpush1.msra.mxu0 0.0
    %800 = vmatprep.subr.mxu0 0.0
    %801 = vmatpush1.msra.mxu0 0.0
    %802 = vmatprep.subr.mxu0 0.0
    %803 = vmatpush1.msra.mxu0 0.0
    %804 = vmatprep.subr.mxu0 0.0
    %805 = vmatpush1.msra.mxu0 0.0
    %806 = vmatprep.subr.mxu0 0.0
    %807 = vmatpush1.msra.mxu0 0.0
    %808 = vmatprep.subr.mxu0 0.0
    %809 = vmatpush1.msra.mxu0 0.0
    %810 = vmatprep.subr.mxu0 0.0
    %811 = vmatpush1.msra.mxu0 0.0
    %812 = vmatprep.subr.mxu0 0.0
    %813 = vmatpush1.msra.mxu0 0.0
    %814 = vmatprep.subr.mxu0 0.0
    %815 = vmatpush1.msra.mxu0 0.0
    %816 = vmatprep.subr.mxu0 0.0
    %817 = vmatpush1.msra.mxu0 0.0
    %818 = vmatprep.subr.mxu0 0.0
    %819 = vmatpush1.msra.mxu0 0.0
    %820 = vmatprep.subr.mxu0 0.0
    %821 = vmatpush1.msra.mxu0 0.0
    %822 = vmatprep.mubr.f32.mxu0 0.0
    %823 = vmatmul.mubr.f32.gmra.mrb[0].mxu0 %v732
    %v824 = vpop.f32.mrb[0].mxu0
    %v825 = vadd.f32 %v756, %v824
    %v826 = vpop.f32.mrb[0].mxu0
    %827 = vdwg.mxu0
    %828 = vmax.xlane.f32.xlu0 %v825
    %v829 = vpop.xlane.xlu0 %828
    %v830 = vsub.f32 %v825, %v829
    %v831 = vmul.f32 %v830, 1.442695
    %v832 = vpow.pop %v831
    %833 = vadd.xlane.f32.xlu0 %v832
    %v834 = vpop.xlane.xlu0 %833
    %v835 = vlog2.pop %v834
    %v836 = vmul.f32 %v835, 0.6931472
    %v837 = vsub.f32 %v830, %v836
    %838 = vst [vmem:[#allocation11] sm:$0xff] %v837
    // Predicated region
    $region58: #{tpu_custom_call.1} parent=1 // pred_check
      _
    $region59: #{tpu_custom_call.1} parent=1 // pred_check_branch
      %840 = sbr.rel (0) target = $region61
    $region60: #{tpu_custom_call.1} parent=1 // pred_region
      %s842 = ssub.s32 128, 128
      %843 = vsyncadd [#allocation4], %s842
      %s845 = sshll.u32 [#allocation11], 4
      %s846 = int_to_ptr.vmem [resolvable:$true] %s845
      %848 = dma.vmem_to_hbm [thread:$0]  %s846, 128, %s8, [#allocation4]
    $region61: #{tpu_custom_call.1} parent=1 // pred_fallthru
      _
    // Predicated region
    $region62: #{tpu_custom_call.1} parent=1 // pred_check
      _
    $region63: #{tpu_custom_call.1} parent=1 // pred_check_branch
      %850 = sbr.rel (0) target = $region65
    $region64: #{tpu_custom_call.1} parent=1 // pred_region
      %s852 = ssub.s32 256, 256
      %853 = vsyncadd [#allocation13], %s852
      %s854 = sshll.u32 [#allocation12], 4
      %s855 = int_to_ptr.vmem [resolvable:$true] %s854
      %860 = dma.vmem_to_hbm [thread:$0]  %s855, 256, %s9, [#allocation13], 128, 128, 8
    $region65: #{tpu_custom_call.1} parent=1 // pred_fallthru
      _
    // Predicated region
    $region66: #{tpu_custom_call.1} parent=1 // pred_check
      _
    $region67: #{tpu_custom_call.1} parent=1 // pred_check_branch
      %862 = sbr.rel (0) target = $region69
    $region68: #{tpu_custom_call.1} parent=1 // pred_region
      %863 = dma.done [#allocation4], 128
    $region69: #{tpu_custom_call.1} parent=1 // pred_fallthru
      _
    // Predicated region
    $region70: #{tpu_custom_call.1} parent=1 // pred_check
      _
    $region71: #{tpu_custom_call.1} parent=1 // pred_check_branch
      %865 = sbr.rel (0) target = $region73
    $region72: #{tpu_custom_call.1} parent=1 // pred_region
      %866 = dma.done [#allocation13], 256
    $region73: #{tpu_custom_call.1} parent=1 // pred_fallthru
      _
    %867 = vsyncpa [#allocation3], 1
    %868 = vsyncpa [#allocation6], 1
    %869 = vsyncpa [#allocation9], 1
    %870 = vsyncpa [#allocation4], 1
    %871 = vsyncpa [#allocation13], 1

</llo_original>
